<compile_context>
chip_gen: v7x
topology: tpu7x:2x2x1
jax: 0.10.0
libtpu: 0.0.40
codegen_flags: <defaults>
</compile_context>

<pallas_src>
import functools
import math

import jax
import jax.numpy as jnp
from jax.experimental import pallas as pl
from jax.experimental.pallas import tpu as pltpu

_VMEM = pltpu.MemorySpace.VMEM
_LEAKY_SLOPE = 0.01
_LN_EPS = 1e-5


def _leaky_relu(x):
    return jnp.where(x >= 0, x, _LEAKY_SLOPE * x)


# ----------------------------------------------------------------------------
# Kernel 1: embedding projection + positional embedding + relay init (mean)
# ----------------------------------------------------------------------------

def _embed_kernel(emb_ref, wt_ref, b_ref, pos_ref, x_ref, relay_ref):
    # per-batch-element block: emb [1, L, E] -> x [1, L, H], relay0 [1, 1, H]
    x = jnp.dot(emb_ref[0], wt_ref[...],
                preferred_element_type=jnp.float32) + b_ref[...]
    x = x + pos_ref[0]
    x_ref[0] = x
    relay_ref[0] = jnp.mean(x, axis=0, keepdims=True)


def embed_and_project(emb, wt, b, pos):
    B, L, E = emb.shape
    H = wt.shape[1]
    return pl.pallas_call(
        _embed_kernel,
        out_shape=(jax.ShapeDtypeStruct((B, L, H), jnp.float32),
                   jax.ShapeDtypeStruct((B, 1, H), jnp.float32)),
        grid=(B,),
        in_specs=[
            pl.BlockSpec((1, L, E), lambda bi: (bi, 0, 0)),
            pl.BlockSpec((E, H), lambda bi: (0, 0)),
            pl.BlockSpec((1, H), lambda bi: (0, 0)),
            pl.BlockSpec((1, L, H), lambda bi: (0, 0, 0)),
        ],
        out_specs=(
            pl.BlockSpec((1, L, H), lambda bi: (bi, 0, 0)),
            pl.BlockSpec((1, 1, H), lambda bi: (bi, 0, 0)),
        ),
        compiler_params=pltpu.CompilerParams(dimension_semantics=("parallel",)),
    )(emb, wt, b, pos)


# ----------------------------------------------------------------------------
# Kernel 2: one fused Star-Transformer layer (ring attention + star attention)
# ----------------------------------------------------------------------------

def _layer_kernel(nodes_ref, relay_ref, embs_ref, smask_ref,
                  ln_g_ref, ln_b_ref,
                  r_qkv_wt_ref, r_qkv_b_ref, r_wo_t_ref, r_bo_ref,
                  s_qkv_wt_ref, s_qkv_b_ref, s_wo_t_ref, s_bo_ref,
                  nodes_out_ref, relay_out_ref,
                  *, num_head, head_dim):
    L = nodes_ref.shape[1]
    NH, HD = num_head, head_dim
    Dp = NH * HD
    scale = 1.0 / math.sqrt(HD)
    NWIN = 5  # [left, center, right, original-embedding, relay]

    nodes = nodes_ref[0]            # [L, H]
    relay = relay_ref[0]            # [1, H]
    embs = embs_ref[0]              # [L, H]
    pad_col = smask_ref[0] > 0.0    # [L+1, 1]; True at padding (row 0 = relay)

    # head-segment matrix: seg[d, n] = 1 iff feature d belongs to head n.
    d_idx = jax.lax.broadcasted_iota(jnp.int32, (Dp, NH), 0)
    n_idx = jax.lax.broadcasted_iota(jnp.int32, (Dp, NH), 1)
    seg = (d_idx // HD == n_idx).astype(jnp.float32)      # [Dp, NH]
    seg_t = seg.T                                         # [NH, Dp]

    # ---- layernorm on nodes (ring-attention input only) ----
    mu = jnp.mean(nodes, axis=-1, keepdims=True)
    xc = nodes - mu
    var = jnp.mean(xc * xc, axis=-1, keepdims=True)
    xn = xc * jax.lax.rsqrt(var + _LN_EPS) * ln_g_ref[...] + ln_b_ref[...]

    # ---- single fused projection: ring Q/K/V + append-feature K/V ----
    xin = jnp.concatenate([xn, embs, relay], axis=0)                   # [2L+1, H]
    proj = jnp.dot(xin, r_qkv_wt_ref[...],
                   preferred_element_type=jnp.float32) + r_qkv_b_ref[...]
    q = proj[:L, :Dp]
    k = proj[:L, Dp:2 * Dp]
    v = proj[:L, 2 * Dp:]
    ak_e = proj[L:2 * L, Dp:2 * Dp]
    av_e = proj[L:2 * L, 2 * Dp:]
    ak_r = jnp.broadcast_to(proj[2 * L:, Dp:2 * Dp], (L, Dp))
    av_r = jnp.broadcast_to(proj[2 * L:, 2 * Dp:], (L, Dp))

    # ---- ring attention (_MSA1): windows built in-kernel (zero-padded edges) ----
    zrow = jnp.zeros((1, Dp), jnp.float32)
    kwin = jnp.stack([jnp.concatenate([zrow, k[:-1]], axis=0), k,
                      jnp.concatenate([k[1:], zrow], axis=0), ak_e, ak_r], axis=0)
    vwin = jnp.stack([jnp.concatenate([zrow, v[:-1]], axis=0), v,
                      jnp.concatenate([v[1:], zrow], axis=0), av_e, av_r], axis=0)

    prod = (q[None, :, :] * kwin).reshape(NWIN * L, Dp)
    s = (jnp.dot(prod, seg, preferred_element_type=jnp.float32)
         * scale).reshape(NWIN, L, NH)                                  # [5, L, NH]
    m = jnp.max(s, axis=0, keepdims=True)
    e = jnp.exp(s - m)
    alpha = e / jnp.sum(e, axis=0, keepdims=True)                       # softmax / window
    alpha_exp = jnp.dot(alpha.reshape(NWIN * L, NH), seg_t,
                        preferred_element_type=jnp.float32).reshape(NWIN, L, Dp)
    att = jnp.sum(alpha_exp * vwin, axis=0)                             # [L, Dp]

    nodes_new = _leaky_relu(
        jnp.dot(att, r_wo_t_ref[...], preferred_element_type=jnp.float32)
        + r_bo_ref[...])                                                # [L, H]

    # ---- star attention (_MSA2): relay attends over [relay; new nodes] ----
    y = jnp.concatenate([relay, nodes_new], axis=0)                     # [L+1, H]
    sproj = jnp.dot(y, s_qkv_wt_ref[...],
                    preferred_element_type=jnp.float32) + s_qkv_b_ref[...]
    sq = sproj[:1, :Dp]                                                 # relay query only
    sk = sproj[:, Dp:2 * Dp]
    sv = sproj[:, 2 * Dp:]
    ss = jnp.dot(sq * sk, seg, preferred_element_type=jnp.float32) * scale   # [L+1, NH]
    ss = jnp.where(pad_col, -1e30, ss)                                  # mask padding
    sm = jnp.max(ss, axis=0, keepdims=True)
    se = jnp.exp(ss - sm)
    salpha = se / jnp.sum(se, axis=0, keepdims=True)
    satt = jnp.sum(jnp.dot(salpha, seg_t, preferred_element_type=jnp.float32) * sv,
                   axis=0, keepdims=True)                               # [1, Dp]
    relay_new = _leaky_relu(
        jnp.dot(satt, s_wo_t_ref[...], preferred_element_type=jnp.float32)
        + s_bo_ref[...])                                                # [1, H]

    # nodes.masked_fill_(ex_mask, 0)
    nodes_out_ref[0] = jnp.where(pad_col[1:, :], 0.0, nodes_new)
    relay_out_ref[0] = relay_new


def star_layer(nodes, relay, embs, smask_col, lp, num_head, head_dim):
    B, L, H = nodes.shape
    Dp = num_head * head_dim

    def per_b(shape):
        return pl.BlockSpec(shape, lambda bi: (bi,) + (0,) * (len(shape) - 1))

    def shared(shape):
        return pl.BlockSpec(shape, lambda bi: (0,) * len(shape))

    return pl.pallas_call(
        functools.partial(_layer_kernel, num_head=num_head, head_dim=head_dim),
        out_shape=(jax.ShapeDtypeStruct((B, L, H), jnp.float32),
                   jax.ShapeDtypeStruct((B, 1, H), jnp.float32)),
        grid=(B,),
        in_specs=[
            per_b((1, L, H)),            # nodes
            per_b((1, 1, H)),            # relay
            per_b((1, L, H)),            # original embeddings (append features)
            per_b((1, L + 1, 1)),        # padding mask column (relay + tokens)
            shared((1, H)), shared((1, H)),                 # layernorm gamma/beta
            shared((H, 3 * Dp)), shared((1, 3 * Dp)),       # ring fused QKV (W^T, b)
            shared((Dp, H)), shared((1, H)),                # ring WO (W^T, b)
            shared((H, 3 * Dp)), shared((1, 3 * Dp)),       # star fused QKV (W^T, b)
            shared((Dp, H)), shared((1, H)),                # star WO (W^T, b)
        ],
        out_specs=(per_b((1, L, H)), per_b((1, 1, H))),
        compiler_params=pltpu.CompilerParams(dimension_semantics=("parallel",)),
    )(nodes, relay, embs, smask_col,
      lp['ln_g'], lp['ln_b'],
      lp['r_qkv_wt'], lp['r_qkv_b'], lp['r_wo_t'], lp['r_bo'],
      lp['s_qkv_wt'], lp['s_qkv_b'], lp['s_wo_t'], lp['s_bo'])


# ----------------------------------------------------------------------------
# Kernel 3: fused pooling (0.5*(relay + max_L nodes)) + NLI classifier head
# ----------------------------------------------------------------------------

def _pool_cls_kernel(n1_ref, r1_ref, n2_ref, r2_ref,
                     w1t_ref, b1_ref, w2t_ref, b2_ref, o_ref):
    y1 = 0.5 * (r1_ref[:, 0, :] + jnp.max(n1_ref[...], axis=1))
    y2 = 0.5 * (r2_ref[:, 0, :] + jnp.max(n2_ref[...], axis=1))
    feat = jnp.concatenate([y1, y2, jnp.abs(y1 - y2), y1 * y2], axis=1)   # [B, 4H]
    h = _leaky_relu(jnp.dot(feat, w1t_ref[...],
                            preferred_element_type=jnp.float32) + b1_ref[...])
    o_ref[...] = jnp.dot(h, w2t_ref[...],
                         preferred_element_type=jnp.float32) + b2_ref[...]


def pool_and_classify(n1, r1, n2, r2, w1t, b1, w2t, b2):
    B = n1.shape[0]
    num_cls = w2t.shape[1]
    return pl.pallas_call(
        _pool_cls_kernel,
        out_shape=jax.ShapeDtypeStruct((B, num_cls), jnp.float32),
        in_specs=[pl.BlockSpec(memory_space=_VMEM)] * 8,
        out_specs=pl.BlockSpec(memory_space=_VMEM),
    )(n1, r1, n2, r2, w1t, b1, w2t, b2)


# ----------------------------------------------------------------------------
# Model glue (plain JAX: embedding gather, mask building, layer loop)
# ----------------------------------------------------------------------------

def star_trans_enc(words, seq_len, params):
    B, L = words.shape
    valid = jnp.arange(L)[None, :] < seq_len[:, None]           # seq_len_to_mask
    pad = jnp.logical_not(valid).astype(jnp.float32)            # 1.0 at padding
    smask_col = jnp.concatenate(
        [jnp.zeros((B, 1), jnp.float32), pad], axis=1)[:, :, None]   # [B, L+1, 1]

    emb = jnp.take(params['embedding'], words, axis=0)          # gather (plain JAX)
    pos = params['pos_emb'][:, :L, :]
    embs, relay = embed_and_project(emb, params['emb_fc_wt'],
                                    params['emb_fc_b'], pos)

    nodes = embs
    for lp in params['layers']:
        nodes, relay = star_layer(nodes, relay, embs, smask_col,
                                  lp, params['num_head'], params['head_dim'])
    return nodes, relay


def stnli_cls_forward(params, words1, words2, seq_len1, seq_len2):
    n1, r1 = star_trans_enc(words1, seq_len1, params)
    n2, r2 = star_trans_enc(words2, seq_len2, params)
    return pool_and_classify(n1, r1, n2, r2,
                             params['cls_w1_t'], params['cls_b1'],
                             params['cls_w2_t'], params['cls_b2'])


# ----------------------------------------------------------------------------
# Deterministic parameter init (weights stored pre-transposed / pre-fused)
# ----------------------------------------------------------------------------

def init_params(key, vocab, emb_dim, hidden, num_layers, num_head, head_dim,
                max_len, cls_hid, num_cls):
    dp = num_head * head_dim
    keys = iter(jax.random.split(key, 16 + num_layers * 16))

    def w(shape, scale=0.1):
        return scale * jax.random.normal(next(keys), shape, jnp.float32)

    params = {
        'num_head': num_head,
        'head_dim': head_dim,
        'embedding': w((vocab, emb_dim), 0.5),
        'emb_fc_wt': w((emb_dim, hidden)),          # pre-transposed [E, H]
        'emb_fc_b': w((1, hidden), 0.01),
        'pos_emb': w((1, max_len, hidden), 0.1),
        'cls_w1_t': w((4 * hidden, cls_hid)),       # pre-transposed [4H, Chid]
        'cls_b1': w((1, cls_hid), 0.01),
        'cls_w2_t': w((cls_hid, num_cls)),          # pre-transposed [Chid, C]
        'cls_b2': w((1, num_cls), 0.01),
        'layers': [],
    }
    for _ in range(num_layers):
        params['layers'].append({
            'ln_g': jnp.ones((1, hidden), jnp.float32),
            'ln_b': jnp.zeros((1, hidden), jnp.float32),
            'r_qkv_wt': w((hidden, 3 * dp)),        # [W_q^T | W_k^T | W_v^T]
            'r_qkv_b': w((1, 3 * dp), 0.01),
            'r_wo_t': w((dp, hidden)),
            'r_bo': w((1, hidden), 0.01),
            's_qkv_wt': w((hidden, 3 * dp)),
            's_qkv_b': w((1, 3 * dp), 0.01),
            's_wo_t': w((dp, hidden)),
            's_bo': w((1, hidden), 0.01),
        })
    return params


if __name__ == "__main__":
    B, L = 2, 8
    vocab, emb_dim = 50, 32
    hidden, num_layers, num_head, head_dim = 32, 2, 4, 8
    max_len, cls_hid, num_cls = 16, 64, 3

    root = jax.random.PRNGKey(0)
    kw1, kw2, kp = jax.random.split(root, 3)
    words1 = jax.random.randint(kw1, (B, L), 0, vocab, dtype=jnp.int32)
    words2 = jax.random.randint(kw2, (B, L), 0, vocab, dtype=jnp.int32)
    seq_len1 = jnp.array([L, 5], dtype=jnp.int32)
    seq_len2 = jnp.array([6, L], dtype=jnp.int32)

    params = init_params(kp, vocab, emb_dim, hidden, num_layers, num_head,
                         head_dim, max_len, cls_hid, num_cls)

    out = stnli_cls_forward(params, words1, words2, seq_len1, seq_len2)
    out = jax.block_until_ready(out)
    assert out.shape == (B, num_cls), out.shape
    assert bool(jnp.all(jnp.isfinite(out)))
    print("KERNEL_OK")
</pallas_src>

<mosaic_0001>
module attributes {stable_mosaic.version = 11 : i64} {
  func.func @_embed_kernel(%arg0: i32, %arg1: memref<1x8x32xf32, #tpu.memory_space<vmem>>, %arg2: memref<32x32xf32, #tpu.memory_space<vmem>>, %arg3: memref<1x32xf32, #tpu.memory_space<vmem>>, %arg4: memref<1x8x32xf32, #tpu.memory_space<vmem>>, %arg5: memref<1x8x32xf32, #tpu.memory_space<vmem>>, %arg6: memref<1x1x32xf32, #tpu.memory_space<vmem>>) attributes {dimension_semantics = [#tpu.dimension_semantics<parallel>], iteration_bounds = array<i64: 2>, scalar_prefetch = 0 : i64, scratch_operands = 0 : i64, tpu.core_type = #tpu.core_type<tc>, window_params = [{transform_indices = @transform_0, window_bounds = array<i64: 1, 8, 32>}, {pipeline_mode = #tpu.pipeline_mode<synchronous>, transform_indices = @transform_1, window_bounds = array<i64: 32, 32>}, {pipeline_mode = #tpu.pipeline_mode<synchronous>, transform_indices = @transform_2, window_bounds = array<i64: 1, 32>}, {pipeline_mode = #tpu.pipeline_mode<synchronous>, transform_indices = @transform_3, window_bounds = array<i64: 1, 8, 32>}, {transform_indices = @transform_4, window_bounds = array<i64: 1, 8, 32>}, {transform_indices = @transform_5, window_bounds = array<i64: 1, 1, 32>}]} {
    %c0 = arith.constant 0 : index
    %c0_0 = arith.constant 0 : index
    %c0_1 = arith.constant 0 : index
    %0 = vector.load %arg1[%c0, %c0_0, %c0_1] : memref<1x8x32xf32, #tpu.memory_space<vmem>>, vector<1x8x32xf32>
    %1 = vector.shape_cast %0 : vector<1x8x32xf32> to vector<8x32xf32>
    %c0_2 = arith.constant 0 : index
    %c0_3 = arith.constant 0 : index
    %2 = vector.load %arg2[%c0_2, %c0_3] : memref<32x32xf32, #tpu.memory_space<vmem>>, vector<32x32xf32>
    %cst = arith.constant dense<0.000000e+00> : vector<8x32xf32>
    %3 = tpu.matmul %1, %2, %cst {dimension_numbers = #tpu.dot_dimension_numbers<[1], [0], [0], [1], [0, 0, 1, 1], [], []>} : vector<8x32xf32>, vector<32x32xf32>, vector<8x32xf32> -> vector<8x32xf32>
    %c0_4 = arith.constant 0 : index
    %c0_5 = arith.constant 0 : index
    %4 = vector.load %arg3[%c0_4, %c0_5] : memref<1x32xf32, #tpu.memory_space<vmem>>, vector<1x32xf32>
    %5 = vector.broadcast %4 : vector<1x32xf32> to vector<8x32xf32>
    %6 = arith.addf %3, %5 : vector<8x32xf32>
    %c0_6 = arith.constant 0 : index
    %c0_7 = arith.constant 0 : index
    %c0_8 = arith.constant 0 : index
    %7 = vector.load %arg4[%c0_6, %c0_7, %c0_8] : memref<1x8x32xf32, #tpu.memory_space<vmem>>, vector<1x8x32xf32>
    %8 = vector.shape_cast %7 : vector<1x8x32xf32> to vector<8x32xf32>
    %9 = arith.addf %6, %8 : vector<8x32xf32>
    %c0_9 = arith.constant 0 : index
    %c0_10 = arith.constant 0 : index
    %c0_11 = arith.constant 0 : index
    %10 = vector.load %arg5[%c0_9, %c0_10, %c0_11] : memref<1x8x32xf32, #tpu.memory_space<vmem>>, vector<1x8x32xf32>
    %11 = vector.shape_cast %10 : vector<1x8x32xf32> to vector<8x32xf32>
    %12 = vector.shape_cast %9 : vector<8x32xf32> to vector<1x8x32xf32>
    tpu.vector_store %arg5[%c0_9, %c0_10, %c0_11], %12 {strides = array<i32>} : memref<1x8x32xf32, #tpu.memory_space<vmem>>, vector<1x8x32xf32>,
    %cst_12 = arith.constant dense<0.000000e+00> : vector<32xf32>
    %13 = vector.multi_reduction <add>, %9, %cst_12 [0] : vector<8x32xf32> to vector<32xf32>
    %14 = vector.shape_cast %13 : vector<32xf32> to vector<1x32xf32>
    %cst_13 = arith.constant 8.000000e+00 : f32
    %15 = vector.broadcast %cst_13 : f32 to vector<1x32xf32>
    %16 = arith.divf %14, %15 : vector<1x32xf32>
    %c0_14 = arith.constant 0 : index
    %c0_15 = arith.constant 0 : index
    %c0_16 = arith.constant 0 : index
    %17 = vector.load %arg6[%c0_14, %c0_15, %c0_16] : memref<1x1x32xf32, #tpu.memory_space<vmem>>, vector<1x1x32xf32>
    %18 = vector.shape_cast %17 : vector<1x1x32xf32> to vector<1x32xf32>
    %19 = vector.shape_cast %16 : vector<1x32xf32> to vector<1x1x32xf32>
    tpu.vector_store %arg6[%c0_14, %c0_15, %c0_16], %19 {strides = array<i32>} : memref<1x1x32xf32, #tpu.memory_space<vmem>>, vector<1x1x32xf32>,
    return
  }
  func.func @transform_0(%arg0: i32) -> (i32, i32, i32) {
    %c0_i32 = arith.constant 0 : i32
    %c0_i32_0 = arith.constant 0 : i32
    %c0_i32_1 = arith.constant 0 : i32
    return %arg0, %c0_i32, %c0_i32_0 : i32, i32, i32
  }
  func.func @transform_1(%arg0: i32) -> (i32, i32) {
    %c0_i32 = arith.constant 0 : i32
    %c0_i32_0 = arith.constant 0 : i32
    %c0_i32_1 = arith.constant 0 : i32
    return %c0_i32, %c0_i32_0 : i32, i32
  }
  func.func @transform_2(%arg0: i32) -> (i32, i32) {
    %c0_i32 = arith.constant 0 : i32
    %c0_i32_0 = arith.constant 0 : i32
    %c0_i32_1 = arith.constant 0 : i32
    return %c0_i32, %c0_i32_0 : i32, i32
  }
  func.func @transform_3(%arg0: i32) -> (i32, i32, i32) {
    %c0_i32 = arith.constant 0 : i32
    %c0_i32_0 = arith.constant 0 : i32
    %c0_i32_1 = arith.constant 0 : i32
    %c0_i32_2 = arith.constant 0 : i32
    return %c0_i32, %c0_i32_0, %c0_i32_1 : i32, i32, i32
  }
  func.func @transform_4(%arg0: i32) -> (i32, i32, i32) {
    %c0_i32 = arith.constant 0 : i32
    %c0_i32_0 = arith.constant 0 : i32
    %c0_i32_1 = arith.constant 0 : i32
    return %arg0, %c0_i32, %c0_i32_0 : i32, i32, i32
  }
  func.func @transform_5(%arg0: i32) -> (i32, i32, i32) {
    %c0_i32 = arith.constant 0 : i32
    %c0_i32_0 = arith.constant 0 : i32
    %c0_i32_1 = arith.constant 0 : i32
    return %arg0, %c0_i32, %c0_i32_0 : i32, i32, i32
  }
}

</mosaic_0001>

<llo_original>
// kernel: tpu_custom_call.1
$region0: #{tpu_custom_call.1}
  #allocation0 [shape = 'u32[]', space=smem, size = 0x4, offset = 0x4, fixed_abs, tag = 'smem constant byte address 0x4 - core index']
  #allocation1 [shape = 'u32[144,128]{1,0:T(1,128)}', space=vmem, size = 0x12000, scoped, tag = 'internal scratch']
  %s0 = inlined_call_operand.hbm [shape: f32[2,8,32], index: 0, kind: input, shape index: {}]
  %s1 = inlined_call_operand.hbm [shape: f32[32,32], index: 1, kind: input, shape index: {}]
  %s2 = inlined_call_operand.vmem [shape: f32[1,32], index: 2, kind: input, shape index: {}]
  %s3 = inlined_call_operand.vmem [shape: f32[1,8,32], index: 3, kind: input, shape index: {}]
  %s4 = inlined_call_operand.hbm [shape: f32[2,8,32], index: 4, kind: output, shape index: {0}]
  %s5 = inlined_call_operand.hbm [shape: f32[2,1,32], index: 5, kind: output, shape index: {1}]
  %6 = xla_tuple %s4, %s5
  %s7 = sld [smem:[#allocation0]]
  $region65: #{tpu_custom_call.1} parent=0
    _
  %s9 = ssub.s32 1, %s7
  %s10 = scalar_select 0, %s9, %s7
  $region1: #{tpu_custom_call.1} parent=0
    #allocation2 [shape = 'u8[8192]{0}', space=vmem, size = 0x2000, scoped, tag = 'input window, operand 0']
    #allocation3 [shape = 's32[2]{0}', space=sflag, size = 0x8, scoped, tag = 'scoped memory for tpu_custom_call.1']
    #allocation4 [shape = 's32[2]{0}', space=sflag, size = 0x8, scoped, tag = 'scoped memory for tpu_custom_call.1']
    #allocation5 [shape = 'u8[16384]{0}', space=vmem, size = 0x4000, scoped, tag = 'input window, operand 1, single buffered']
    #allocation6 [shape = 's32[1]{0}', space=sflag, size = 0x4, scoped, tag = 'scoped memory for tpu_custom_call.1']
    #allocation7 [shape = 'u8[8192]{0}', space=vmem, size = 0x2000, scoped, tag = 'output window, operand 0']
    #allocation8 [shape = 'u8[1024]{0}', space=vmem, size = 0x400, scoped, tag = 'output window, operand 1']
    #allocation9 [shape = 's32[2]{0}', space=sflag, size = 0x8, scoped, tag = 'scoped memory for tpu_custom_call.1']
    %11 = vsyncpa [#allocation3], 0
    %s12 = scalar_lea.sflag [#allocation3], 1
    %13 = vsyncpa %s12, 0
    %14 = vsyncpa [#allocation6], 0
    %15 = vsyncpa [#allocation4], 0
    %s16 = scalar_lea.sflag [#allocation4], 1
    %17 = vsyncpa %s16, 0
    %18 = vsyncpa [#allocation9], 0
    %s19 = scalar_lea.sflag [#allocation9], 1
    %20 = vsyncpa %s19, 0
    loop: start=0, step=1, limit=4
    $region2: #{tpu_custom_call.1} parent=1 // loop_pre_header
      _
    $region3: #{tpu_custom_call.1} parent=1 // loop_header
      %s22 = sphi 0, %s26
      %p23 = scmp.ge.s32.totalorder %s22, 4
      %s32 = sphi 0, %s34
      %s35 = sphi 0, %s32
      %s36 = sphi 0, %s35
      %s52 = sphi 0, %s36
      %s56 = sphi 0, %s56
      %s58 = sphi 0, %s56
      %s59 = sphi 0, %s58
      %s73 = sphi 0, %s59
      %s77 = sphi 0, %s77
      %s79 = sphi 0, %s77
      %s80 = sphi 0, %s79
      %s94 = sphi 0, %s80
      %s98 = sphi 0, %s98
      %s100 = sphi 0, %s98
      %s101 = sphi 0, %s100
      %s115 = sphi 0, %s101
      %s121 = sphi 0, %s123
      %s124 = sphi 0, %s121
      %s125 = sphi 0, %s124
      %s141 = sphi 0, %s125
      %s147 = sphi 0, %s149
      %s150 = sphi 0, %s147
      %s151 = sphi 0, %s150
      %s167 = sphi 0, %s151
    $region4: #{tpu_custom_call.1} parent=1 // loop_header_branch
      %25 = sbr.rel (%p23) target = $region8
    $region5: #{tpu_custom_call.1} parent=1 // loop_body
      %s27 = ssub.s32 %s22, 1
      %s28 = ssub.s32 %s22, 2
      %s29 = sadd.s32 %s22, 1
      %s30 = ssub.s32 %s22, %s29
      %p31 = scmp.eq.s32.totalorder %s30, 0
      %s33 = sadd.s32 %s32, 1
      %s34 = scalar_select %p31, %s32, %s33
      %p37 = pneg %p31
      %p38 = scmp.eq.s32.totalorder %s22, 1
      %p39 = por %p37, %p38
      %p40 = scmp.ne.s32.totalorder %s32, %s35
      %p41 = scmp.eq.s32.totalorder %s22, 0
      %p42 = por %p40, %p41
      %p43 = scmp.ne.s32.totalorder %s32, %s35
      %p44 = scmp.eq.s32.totalorder %s27, 1
      %p45 = por %p43, %p44
      %p46 = scmp.ne.s32.totalorder %s35, %s36
      %p47 = scmp.eq.s32.totalorder %s27, 0
      %p48 = por %p46, %p47
      %p49 = scmp.ne.s32.totalorder %s35, %s36
      %p50 = scmp.eq.s32.totalorder %s28, 1
      %p51 = por %p49, %p50
      %p53 = scmp.ne.s32.totalorder %s36, %s52
      %p54 = scmp.eq.s32.totalorder %s28, 0
      %p55 = por %p53, %p54
      %s57 = sadd.s32 %s56, 1
      %p60 = scmp.eq.s32.totalorder %s22, 1
      %p61 = scmp.ne.s32.totalorder %s56, %s58
      %p62 = scmp.eq.s32.totalorder %s22, 0
      %p63 = por %p61, %p62
      %p64 = scmp.ne.s32.totalorder %s56, %s58
      %p65 = scmp.eq.s32.totalorder %s27, 1
      %p66 = por %p64, %p65
      %p67 = scmp.ne.s32.totalorder %s58, %s59
      %p68 = scmp.eq.s32.totalorder %s27, 0
      %p69 = por %p67, %p68
      %p70 = scmp.ne.s32.totalorder %s58, %s59
      %p71 = scmp.eq.s32.totalorder %s28, 1
      %p72 = por %p70, %p71
      %p74 = scmp.ne.s32.totalorder %s59, %s73
      %p75 = scmp.eq.s32.totalorder %s28, 0
      %p76 = por %p74, %p75
      %s78 = sadd.s32 %s77, 1
      %p81 = scmp.eq.s32.totalorder %s22, 1
      %p82 = scmp.ne.s32.totalorder %s77, %s79
      %p83 = scmp.eq.s32.totalorder %s22, 0
      %p84 = por %p82, %p83
      %p85 = scmp.ne.s32.totalorder %s77, %s79
      %p86 = scmp.eq.s32.totalorder %s27, 1
      %p87 = por %p85, %p86
      %p88 = scmp.ne.s32.totalorder %s79, %s80
      %p89 = scmp.eq.s32.totalorder %s27, 0
      %p90 = por %p88, %p89
      %p91 = scmp.ne.s32.totalorder %s79, %s80
      %p92 = scmp.eq.s32.totalorder %s28, 1
      %p93 = por %p91, %p92
      %p95 = scmp.ne.s32.totalorder %s80, %s94
      %p96 = scmp.eq.s32.totalorder %s28, 0
      %p97 = por %p95, %p96
      %s99 = sadd.s32 %s98, 1
      %p102 = scmp.eq.s32.totalorder %s22, 1
      %p103 = scmp.ne.s32.totalorder %s98, %s100
      %p104 = scmp.eq.s32.totalorder %s22, 0
      %p105 = por %p103, %p104
      %p106 = scmp.ne.s32.totalorder %s98, %s100
      %p107 = scmp.eq.s32.totalorder %s27, 1
      %p108 = por %p106, %p107
      %p109 = scmp.ne.s32.totalorder %s100, %s101
      %p110 = scmp.eq.s32.totalorder %s27, 0
      %p111 = por %p109, %p110
      %p112 = scmp.ne.s32.totalorder %s100, %s101
      %p113 = scmp.eq.s32.totalorder %s28, 1
      %p114 = por %p112, %p113
      %p116 = scmp.ne.s32.totalorder %s101, %s115
      %p117 = scmp.eq.s32.totalorder %s28, 0
      %p118 = por %p116, %p117
      %s119 = ssub.s32 %s22, %s29
      %p120 = scmp.eq.s32.totalorder %s119, 0
      %s122 = sadd.s32 %s121, 1
      %s123 = scalar_select %p120, %s121, %s122
      %p126 = pneg %p120
      %p127 = scmp.eq.s32.totalorder %s22, 1
      %p128 = por %p126, %p127
      %p129 = scmp.ne.s32.totalorder %s121, %s124
      %p130 = scmp.eq.s32.totalorder %s22, 0
      %p131 = por %p129, %p130
      %p132 = scmp.ne.s32.totalorder %s121, %s124
      %p133 = scmp.eq.s32.totalorder %s27, 1
      %p134 = por %p132, %p133
      %p135 = scmp.ne.s32.totalorder %s124, %s125
      %p136 = scmp.eq.s32.totalorder %s27, 0
      %p137 = por %p135, %p136
      %p138 = scmp.ne.s32.totalorder %s124, %s125
      %p139 = scmp.eq.s32.totalorder %s28, 1
      %p140 = por %p138, %p139
      %p142 = scmp.ne.s32.totalorder %s125, %s141
      %p143 = scmp.eq.s32.totalorder %s28, 0
      %p144 = por %p142, %p143
      %s145 = ssub.s32 %s22, %s29
      %p146 = scmp.eq.s32.totalorder %s145, 0
      %s148 = sadd.s32 %s147, 1
      %s149 = scalar_select %p146, %s147, %s148
      %p152 = pneg %p146
      %p153 = scmp.eq.s32.totalorder %s22, 1
      %p154 = por %p152, %p153
      %p155 = scmp.ne.s32.totalorder %s147, %s150
      %p156 = scmp.eq.s32.totalorder %s22, 0
      %p157 = por %p155, %p156
      %p158 = scmp.ne.s32.totalorder %s147, %s150
      %p159 = scmp.eq.s32.totalorder %s27, 1
      %p160 = por %p158, %p159
      %p161 = scmp.ne.s32.totalorder %s150, %s151
      %p162 = scmp.eq.s32.totalorder %s27, 0
      %p163 = por %p161, %p162
      %p164 = scmp.ne.s32.totalorder %s150, %s151
      %p165 = scmp.eq.s32.totalorder %s28, 1
      %p166 = por %p164, %p165
      %p168 = scmp.ne.s32.totalorder %s151, %s167
      %p169 = scmp.eq.s32.totalorder %s28, 0
      %p170 = por %p168, %p169
      %p171 = scmp.le.s32.totalorder 1, %s22
      %p172 = scmp.lt.s32.totalorder %s22, 3
      %p173 = pnand %p171, %p172
      %p174 = pneg %p173
      // Predicated region
      $region9: #{tpu_custom_call.1} parent=5 // pred_check
        _
      $region10: #{tpu_custom_call.1} parent=5 // pred_check_branch
        %176 = sbr.rel (%p173) target = $region12
      $region11: #{tpu_custom_call.1} parent=5 // pred_region
        %s177 = ssub.s32 %s22, 1
        // Predicated region
        $region13: #{tpu_custom_call.1} parent=11 // pred_check
          %p178 = pneg %p69
        $region14: #{tpu_custom_call.1} parent=11 // pred_check_branch
          %180 = sbr.rel (%p178) target = $region16
        $region15: #{tpu_custom_call.1} parent=11 // pred_region
          %s182 = ssub.s32 512, 512
          %183 = vsyncadd [#allocation6], %s182
          %s184 = sshll.u32 [#allocation5], 4
          %s185 = int_to_ptr.vmem [resolvable:$true] %s184
          %190 = dma.hbm_to_vmem [thread:$0]  %s1, 512, %s185, [#allocation6], 128, 128, 8
        $region16: #{tpu_custom_call.1} parent=11 // pred_fallthru
          _
        // Predicated region
        $region17: #{tpu_custom_call.1} parent=11 // pred_check
          %p191 = pneg %p90
        $region18: #{tpu_custom_call.1} parent=11 // pred_check_branch
          %193 = sbr.rel (%p191) target = $region20
        $region19: #{tpu_custom_call.1} parent=11 // pred_region
          _
        $region20: #{tpu_custom_call.1} parent=11 // pred_fallthru
          _
        // Predicated region
        $region21: #{tpu_custom_call.1} parent=11 // pred_check
          %p194 = pneg %p111
        $region22: #{tpu_custom_call.1} parent=11 // pred_check_branch
          %196 = sbr.rel (%p194) target = $region24
        $region23: #{tpu_custom_call.1} parent=11 // pred_region
          _
        $region24: #{tpu_custom_call.1} parent=11 // pred_fallthru
          _
      $region12: #{tpu_custom_call.1} parent=5 // pred_fallthru
        _
      %p197 = scmp.lt.s32.totalorder %s22, 2
      // Predicated region
      $region25: #{tpu_custom_call.1} parent=5 // pred_check
        %p198 = pneg %p197
      $region26: #{tpu_custom_call.1} parent=5 // pred_check_branch
        %200 = sbr.rel (%p198) target = $region28
      $region27: #{tpu_custom_call.1} parent=5 // pred_region
        // Predicated region
        $region29: #{tpu_custom_call.1} parent=27 // pred_check
          %p201 = pneg %p42
        $region30: #{tpu_custom_call.1} parent=27 // pred_check_branch
          %203 = sbr.rel (%p201) target = $region32
        $region31: #{tpu_custom_call.1} parent=27 // pred_region
          %s204 = sand.u32 %s32, 1
          %s205 = scalar_lea.sflag [#allocation3], %s204
          %s206 = sand.u32 %s32, 1
          %s207 = smul.addr %s206, 8
          %s208 = scalar_lea.vmem [#allocation2], %s207
          %s210 = ssub.s32 128, 128
          %211 = vsyncadd %s205, %s210
          %s212 = smul.addr %s22, 128
          %s213 = scalar_lea.hbm %s0, %s212
          %s215 = sshll.u32 %s208, 4
          %s216 = int_to_ptr.vmem [resolvable:$true] %s215
          %218 = dma.hbm_to_vmem [thread:$0]  %s213, 128, %s216, %s205
        $region32: #{tpu_custom_call.1} parent=27 // pred_fallthru
          _
      $region28: #{tpu_custom_call.1} parent=5 // pred_fallthru
        _
      %p219 = scmp.le.s32.totalorder 1, %s22
      %p220 = scmp.lt.s32.totalorder %s22, 3
      %p221 = pnand %p219, %p220
      %p222 = pneg %p221
      // Predicated region
      $region33: #{tpu_custom_call.1} parent=5 // pred_check
        _
      $region34: #{tpu_custom_call.1} parent=5 // pred_check_branch
        %224 = sbr.rel (%p221) target = $region36
      $region35: #{tpu_custom_call.1} parent=5 // pred_region
        %s225 = ssub.s32 %s22, 1
        %s226 = sand.u32 %s35, 1
        %s227 = scalar_lea.sflag [#allocation3], %s226
        %s228 = sand.u32 %s35, 1
        %s229 = smul.addr %s228, 8
        %s230 = scalar_lea.vmem [#allocation2], %s229
        // Predicated region
        $region37: #{tpu_custom_call.1} parent=35 // pred_check
          %p231 = pneg %p48
        $region38: #{tpu_custom_call.1} parent=35 // pred_check_branch
          %233 = sbr.rel (%p231) target = $region40
        $region39: #{tpu_custom_call.1} parent=35 // pred_region
          %234 = dma.done %s227, 128
        $region40: #{tpu_custom_call.1} parent=35 // pred_fallthru
          _
        // Predicated region
        $region41: #{tpu_custom_call.1} parent=35 // pred_check
          %p235 = pneg %p69
        $region42: #{tpu_custom_call.1} parent=35 // pred_check_branch
          %237 = sbr.rel (%p235) target = $region44
        $region43: #{tpu_custom_call.1} parent=35 // pred_region
          %238 = dma.done [#allocation6], 512
        $region44: #{tpu_custom_call.1} parent=35 // pred_fallthru
          _
        %s239 = sand.u32 %s35, 1
        %s240 = scalar_lea.sflag [#allocation3], %s239
        %s241 = sand.u32 %s35, 1
        %s242 = smul.addr %s241, 8
        %s243 = scalar_lea.vmem [#allocation2], %s242
        %p244 = pneg %p48
        %p245 = pneg %p45
        %p246 = pneg %p69
        %p247 = pneg %p66
        %p248 = pneg %p90
        %p249 = pneg %p87
        %p250 = pneg %p111
        %p251 = pneg %p108
        %p252 = pneg %p137
        %p253 = pneg %p134
        %s254 = sand.u32 %s124, 1
        %s255 = scalar_lea.sflag [#allocation4], %s254
        %s256 = sand.u32 %s124, 1
        %s257 = smul.addr %s256, 8
        %s258 = scalar_lea.vmem [#allocation7], %s257
        %p259 = pneg %p163
        %p260 = pneg %p160
        %s261 = sand.u32 %s150, 1
        %s262 = scalar_lea.sflag [#allocation9], %s261
        %s263 = sand.u32 %s150, 1
        %s264 = scalar_lea.vmem [#allocation8], %s263
        %v265 = vld [vmem:[%s230] sm:$0xff]
        %v266 = vld [vmem:[#allocation5] sm:$0xff]
        %v267 = vld [vmem:[#allocation5 + $0x8] sm:$0xff]
        %v268 = vld [vmem:[#allocation5 + $0x10] sm:$0xff]
        %v269 = vld [vmem:[#allocation5 + $0x18] sm:$0xff]
        %v270 = vld [vmem:[%s2] sm:$0x1]
        %v272 = vlaneseq
        %v273 = vshrl.u32 %v272, 7
        %v274 = vsub.s32 0, %v273
        %v275 = vrot.slane %v270, %v274
        %vm277 = vcmask 261120
        %v279 = vsel %vm277, %v265, 0
        %281 = vmatprep.subr.mxu0 0.0
        %282 = vmatpush1.msra.mxu0 %v266
        %283 = vmatprep.subr.mxu0 0.0
        %284 = vmatpush1.msra.mxu0 %v267
        %285 = vmatprep.subr.mxu0 0.0
        %286 = vmatpush1.msra.mxu0 %v268
        %287 = vmatprep.subr.mxu0 0.0
        %288 = vmatpush1.msra.mxu0 %v269
        %289 = vmatprep.subr.mxu0 0.0
        %290 = vmatpush1.msra.mxu0 0.0
        %291 = vmatprep.subr.mxu0 0.0
        %292 = vmatpush1.msra.mxu0 0.0
        %293 = vmatprep.subr.mxu0 0.0
        %294 = vmatpush1.msra.mxu0 0.0
        %295 = vmatprep.subr.mxu0 0.0
        %296 = vmatpush1.msra.mxu0 0.0
        %297 = vmatprep.subr.mxu0 0.0
        %298 = vmatpush1.msra.mxu0 0.0
        %299 = vmatprep.subr.mxu0 0.0
        %300 = vmatpush1.msra.mxu0 0.0
        %301 = vmatprep.subr.mxu0 0.0
        %302 = vmatpush1.msra.mxu0 0.0
        %303 = vmatprep.subr.mxu0 0.0
        %304 = vmatpush1.msra.mxu0 0.0
        %305 = vmatprep.subr.mxu0 0.0
        %306 = vmatpush1.msra.mxu0 0.0
        %307 = vmatprep.subr.mxu0 0.0
        %308 = vmatpush1.msra.mxu0 0.0
        %309 = vmatprep.subr.mxu0 0.0
        %310 = vmatpush1.msra.mxu0 0.0
        %311 = vmatprep.subr.mxu0 0.0
        %312 = vmatpush1.msra.mxu0 0.0
        %313 = vmatprep.subr.mxu0 0.0
        %314 = vmatpush1.msra.mxu0 0.0
        %315 = vmatprep.subr.mxu0 0.0
        %316 = vmatpush1.msra.mxu0 0.0
        %317 = vmatprep.subr.mxu0 0.0
        %318 = vmatpush1.msra.mxu0 0.0
        %319 = vmatprep.subr.mxu0 0.0
        %320 = vmatpush1.msra.mxu0 0.0
        %321 = vmatprep.subr.mxu0 0.0
        %322 = vmatpush1.msra.mxu0 0.0
        %323 = vmatprep.subr.mxu0 0.0
        %324 = vmatpush1.msra.mxu0 0.0
        %325 = vmatprep.subr.mxu0 0.0
        %326 = vmatpush1.msra.mxu0 0.0
        %327 = vmatprep.subr.mxu0 0.0
        %328 = vmatpush1.msra.mxu0 0.0
        %329 = vmatprep.subr.mxu0 0.0
        %330 = vmatpush1.msra.mxu0 0.0
        %331 = vmatprep.subr.mxu0 0.0
        %332 = vmatpush1.msra.mxu0 0.0
        %333 = vmatprep.subr.mxu0 0.0
        %334 = vmatpush1.msra.mxu0 0.0
        %335 = vmatprep.subr.mxu0 0.0
        %336 = vmatpush1.msra.mxu0 0.0
        %337 = vmatprep.subr.mxu0 0.0
        %338 = vmatpush1.msra.mxu0 0.0
        %339 = vmatprep.subr.mxu0 0.0
        %340 = vmatpush1.msra.mxu0 0.0
        %341 = vmatprep.subr.mxu0 0.0
        %342 = vmatpush1.msra.mxu0 0.0
        %343 = vmatprep.subr.mxu0 0.0
        %344 = vmatpush1.msra.mxu0 0.0
        %345 = vmatprep.mubr.f32.mxu0 0.0
        %346 = vmatmul.mubr.f32.gmra.mrb[0].mxu0 %v279
        %v347 = vpop.f32.mrb[0].mxu0
        %v348 = vadd.f32 %v275, %v347
        %v349 = vpop.f32.mrb[0].mxu0
        %350 = vdwg.mxu0
        %v351 = vld [vmem:[%s3] sm:$0xff]
        %v352 = vadd.f32 %v348, %v351
        %353 = vst.msk [vmem:[%s258] sm:$0xff] %vm277, %v352
        %v354 = vsel %vm277, %v352, 0.0
        %v355 = vrot.slane %v354, 4
        %v356 = vadd.f32 %v354, %v355
        %v357 = vrot.slane %v356, 2
        %v358 = vadd.f32 %v356, %v357
        %v359 = vrot.slane %v358, 1
        %v360 = vadd.f32 %v358, %v359
        %v361 = vrcp.pop 8.0
        %v362 = vmul.f32 %v360, %v361
        %vm363 = vcmask 253952
        %364 = vst.msk [vmem:[%s264] sm:$0x1] %vm363, %v362
        %s365 = sand.u32 %s124, 1
        %s366 = scalar_lea.sflag [#allocation4], %s365
        %s367 = sand.u32 %s124, 1
        %s368 = smul.addr %s367, 8
        %s369 = scalar_lea.vmem [#allocation7], %s368
        %s370 = sand.u32 %s150, 1
        %s371 = scalar_lea.sflag [#allocation9], %s370
        %s372 = sand.u32 %s150, 1
        %s373 = scalar_lea.vmem [#allocation8], %s372
        // Predicated region
        $region45: #{tpu_custom_call.1} parent=35 // pred_check
          %p374 = pneg %p134
        $region46: #{tpu_custom_call.1} parent=35 // pred_check_branch
          %376 = sbr.rel (%p374) target = $region48
        $region47: #{tpu_custom_call.1} parent=35 // pred_region
          %s378 = ssub.s32 128, 128
          %379 = vsyncadd %s366, %s378
          %s380 = smul.addr %s27, 128
          %s381 = scalar_lea.hbm %s4, %s380
          %s383 = sshll.u32 %s369, 4
          %s384 = int_to_ptr.vmem [resolvable:$true] %s383
          %386 = dma.vmem_to_hbm [thread:$0]  %s384, 128, %s381, %s366
        $region48: #{tpu_custom_call.1} parent=35 // pred_fallthru
          _
        // Predicated region
        $region49: #{tpu_custom_call.1} parent=35 // pred_check
          %p387 = pneg %p160
        $region50: #{tpu_custom_call.1} parent=35 // pred_check_branch
          %389 = sbr.rel (%p387) target = $region52
        $region51: #{tpu_custom_call.1} parent=35 // pred_region
          %s391 = ssub.s32 16, 16
          %392 = vsyncadd %s371, %s391
          %s393 = smul.addr %s27, 16
          %s394 = scalar_lea.hbm %s5, %s393
          %s396 = sshll.u32 %s373, 4
          %s397 = int_to_ptr.vmem [resolvable:$true] %s396
          %399 = dma.vmem_to_hbm [thread:$0]  %s397, 16, %s394, %s371
        $region52: #{tpu_custom_call.1} parent=35 // pred_fallthru
          _
      $region36: #{tpu_custom_call.1} parent=5 // pred_fallthru
        _
      %p400 = scmp.le.s32.totalorder 2, %s22
      // Predicated region
      $region53: #{tpu_custom_call.1} parent=5 // pred_check
        %p401 = pneg %p400
      $region54: #{tpu_custom_call.1} parent=5 // pred_check_branch
        %403 = sbr.rel (%p401) target = $region56
      $region55: #{tpu_custom_call.1} parent=5 // pred_region
        %s404 = ssub.s32 %s22, 2
        // Predicated region
        $region57: #{tpu_custom_call.1} parent=55 // pred_check
          %p405 = pneg %p140
        $region58: #{tpu_custom_call.1} parent=55 // pred_check_branch
          %407 = sbr.rel (%p405) target = $region60
        $region59: #{tpu_custom_call.1} parent=55 // pred_region
          %s408 = sand.u32 %s125, 1
          %s409 = scalar_lea.sflag [#allocation4], %s408
          %s410 = sand.u32 %s125, 1
          %s411 = smul.addr %s410, 8
          %s412 = scalar_lea.vmem [#allocation7], %s411
          %413 = dma.done %s409, 128
        $region60: #{tpu_custom_call.1} parent=55 // pred_fallthru
          _
        // Predicated region
        $region61: #{tpu_custom_call.1} parent=55 // pred_check
          %p414 = pneg %p166
        $region62: #{tpu_custom_call.1} parent=55 // pred_check_branch
          %416 = sbr.rel (%p414) target = $region64
        $region63: #{tpu_custom_call.1} parent=55 // pred_region
          %s417 = sand.u32 %s151, 1
          %s418 = scalar_lea.sflag [#allocation9], %s417
          %s419 = sand.u32 %s151, 1
          %s420 = scalar_lea.vmem [#allocation8], %s419
          %421 = dma.done %s418, 16
        $region64: #{tpu_custom_call.1} parent=55 // pred_fallthru
          _
      $region56: #{tpu_custom_call.1} parent=5 // pred_fallthru
        _
    $region6: #{tpu_custom_call.1} parent=1 // loop_footer
      %s26 = sadd.s32 1, %s22
    $region7: #{tpu_custom_call.1} parent=1 // loop_footer_branch
      %21 = sbr.rel target = $region3
    $region8: #{tpu_custom_call.1} parent=1 // loop_exit
      _
    %422 = vsyncpa [#allocation3], 1
    %s423 = scalar_lea.sflag [#allocation3], 1
    %424 = vsyncpa %s423, 1
    %425 = vsyncpa [#allocation6], 1
    %426 = vsyncpa [#allocation4], 1
    %s427 = scalar_lea.sflag [#allocation4], 1
    %428 = vsyncpa %s427, 1
    %429 = vsyncpa [#allocation9], 1
    %s430 = scalar_lea.sflag [#allocation9], 1
    %431 = vsyncpa %s430, 1

</llo_original>
